<compile_context>
chip_gen: v5e
topology: v5e:2x2
jax: 0.10.0
libtpu: 0.0.40
codegen_flags: <defaults>
</compile_context>

<pallas_src>
import functools

import jax
import jax.numpy as jnp
from jax.experimental import pallas as pl
from jax.experimental.pallas import tpu as pltpu


def _round_up(a: int, b: int) -> int:
    return (a + b - 1) // b * b


def _cdiv(a: int, b: int) -> int:
    return (a + b - 1) // b


def _threshold_u32(p: float) -> int:
    """keep element iff u32_random >= threshold  (P(keep) = 1 - p)."""
    t = int(round(p * 4294967296.0))
    # clamp so p > 0 never rounds to 0 (which would silently disable dropout)
    return max(1, min(t, 4294967295))


# ---------------------------------------------------------------------------
# Kernel bodies.  Both compute: out = where(bits >= p*2^32, x/(1-p), 0)
# ---------------------------------------------------------------------------
def _dropout_kernel_hwprng(seed_ref, x_ref, o_ref, *, threshold: int, scale: float):
    """Hardware-PRNG variant: ~3 vector ops/element -> HBM-bound."""
    # Independent stream per grid step.  NOTE: mask is tiling-dependent; a
    # backward pass recomputing the mask must use the identical tiling/seed.
    pltpu.prng_seed(seed_ref[0] + pl.program_id(0))
    bits = pltpu.prng_random_bits(x_ref.shape)
    if bits.dtype != jnp.uint32:
        bits = pltpu.bitcast(bits, jnp.uint32)
    keep = bits >= jnp.uint32(threshold)
    x = x_ref[...]
    o_ref[...] = jnp.where(keep, x * jnp.asarray(scale, x_ref.dtype),
                           jnp.zeros_like(x))


def _dropout_kernel_hash(seed_ref, x_ref, o_ref, *, threshold: int, scale: float):
    """Fallback: counter-based hash (trimmed 2-multiply mixer).

    Mask is tiling-invariant per global element index (mod 2^32).
    """
    tr, c = x_ref.shape
    row_ids = jax.lax.broadcasted_iota(jnp.int32, (tr, c), 0)
    col_ids = jax.lax.broadcasted_iota(jnp.int32, (tr, c), 1)
    # global element index; int32 wrap == uint32 wrap after the cast below
    gidx = row_ids * c + col_ids + pl.program_id(0) * (tr * c)
    u = gidx.astype(jnp.uint32)
    seed_term = seed_ref[0].astype(jnp.uint32) * jnp.uint32(0x85EBCA77)  # scalar
    h = u * jnp.uint32(0x9E3779B1) + seed_term
    h = h ^ (h >> 16)
    h = h * jnp.uint32(0x85EBCA6B)
    h = h ^ (h >> 13)
    keep = h >= jnp.uint32(threshold)
    x = x_ref[...]
    o_ref[...] = jnp.where(keep, x * jnp.asarray(scale, x_ref.dtype),
                           jnp.zeros_like(x))


@functools.lru_cache(maxsize=None)
def _hw_prng_available() -> bool:
    """True iff pltpu.prng_seed / prng_random_bits lower and run here."""
    def probe_kernel(seed_ref, o_ref):
        pltpu.prng_seed(seed_ref[0])
        bits = pltpu.prng_random_bits(o_ref.shape)
        if bits.dtype != jnp.uint32:
            bits = pltpu.bitcast(bits, jnp.uint32)
        o_ref[...] = bits

    try:
        fn = pl.pallas_call(
            probe_kernel,
            out_shape=jax.ShapeDtypeStruct((8, 128), jnp.uint32),
            in_specs=[pl.BlockSpec(memory_space=pltpu.MemorySpace.SMEM)],
        )
        jax.block_until_ready(fn(jnp.zeros((1,), jnp.int32)))
        return True
    except Exception:
        return False


def fairseq_dropout(x,
                    p: float,
                    seed: int = 0,
                    training: bool = True,
                    apply_during_inference: bool = False,
                    inplace: bool = False):
    """JAX/Pallas equivalent of FairseqDropout.forward."""
    if not (p > 0 and (training or apply_during_inference)):
        return x  # identity path, exactly like the PyTorch module
    if p >= 1.0:
        return jnp.zeros_like(x)

    orig_shape = x.shape
    total = int(x.size)
    if total == 0:
        return x

    itemsize = jnp.dtype(x.dtype).itemsize
    sublane = {4: 8, 2: 16, 1: 32}.get(itemsize, 8)

    # ---- lane-dense layout; copy-free whenever total is a multiple of 128 ----
    if total % 128 == 0:
        lane_c = next(c for c in (1024, 512, 256, 128) if total % c == 0)
        rows = total // lane_c
        x2d = x.reshape(rows, lane_c)
        padded = False
    else:
        # rare ragged fallback: pay one pad + one slice (extra HBM pass)
        lane_c = 128
        rows = _cdiv(total, lane_c)
        x2d = jnp.pad(x.reshape(-1), (0, rows * lane_c - total)).reshape(rows, lane_c)
        padded = True

    # ---- tiles: ~4 MiB (safe on v7x 64 MiB VMEM, large enough for v5e/v6e),
    #      >= 4 grid steps when possible (v7x megacore), sublane-aligned;
    #      a partial last block is masked by Pallas automatically ----
    target_tile_bytes = 4 << 20
    cap_rows = max(sublane,
                   (target_tile_bytes // (lane_c * itemsize)) // sublane * sublane)
    if rows <= sublane:
        tile_rows = rows                               # full-extent block
    else:
        want = _round_up(_cdiv(rows, 4), sublane)      # aim for >= 4 steps
        tile_rows = max(sublane, min(cap_rows, want))
    grid = (_cdiv(rows, tile_rows),)

    threshold = _threshold_u32(float(p))
    # NOTE: scale is applied in the input dtype (quantized for bf16 inputs).
    scale = 1.0 / (1.0 - float(p))
    kernel = _dropout_kernel_hwprng if _hw_prng_available() else _dropout_kernel_hash

    seed_arr = jnp.asarray(seed, dtype=jnp.int32).reshape(1)

    out2d = pl.pallas_call(
        functools.partial(kernel, threshold=threshold, scale=scale),
        out_shape=jax.ShapeDtypeStruct(x2d.shape, x2d.dtype),
        grid=grid,
        in_specs=[
            pl.BlockSpec(memory_space=pltpu.MemorySpace.SMEM),    # seed scalar
            pl.BlockSpec((tile_rows, lane_c), lambda i: (i, 0)),  # x tile
        ],
        out_specs=pl.BlockSpec((tile_rows, lane_c), lambda i: (i, 0)),
        compiler_params=pltpu.CompilerParams(
            dimension_semantics=("parallel",),
            vmem_limit_bytes=48 << 20,
        ),
        cost_estimate=pl.CostEstimate(
            flops=0,
            transcendentals=0,
            bytes_accessed=2 * rows * lane_c * itemsize),
        input_output_aliases=({1: 0} if inplace else {}),
    )(seed_arr, x2d)

    if padded:
        return out2d.reshape(-1)[:total].reshape(orig_shape)
    return out2d.reshape(orig_shape)


if __name__ == "__main__":
    key = jax.random.PRNGKey(0)
    # transformer-ish input: batch=2, seq=8, hidden=32
    x = jax.random.normal(key, (2, 8, 32), dtype=jnp.float32)
    p = 0.25

    # training path: dropout applied in the Pallas kernel
    y_train = jax.block_until_ready(fairseq_dropout(x, p=p, seed=1234,
                                                    training=True))
    # eval path: identity (matches PyTorch module when not training)
    y_eval = jax.block_until_ready(fairseq_dropout(x, p=p, training=False))

    assert y_train.shape == x.shape and y_train.dtype == x.dtype
    assert jnp.array_equal(y_eval, x)
    nz = y_train != 0
    # surviving elements must equal x / (1 - p)
    assert jnp.allclose(
        jnp.where(nz, y_train, 0.0),
        jnp.where(nz, x / (1.0 - p), 0.0),
        rtol=1e-5, atol=1e-5,
    )
    drop_frac = 1.0 - float(jnp.mean(nz.astype(jnp.float32)))
    assert 0.05 < drop_frac < 0.5, drop_frac

    # wide lane-dense path (C=1024, multi-step grid) + bf16 math
    xb = jax.random.normal(jax.random.PRNGKey(1), (4, 128, 256),
                           dtype=jnp.bfloat16)
    yb = jax.block_until_ready(fairseq_dropout(xb, p=0.1, seed=7,
                                               training=True))
    assert yb.shape == xb.shape and yb.dtype == xb.dtype
    drop_b = 1.0 - float(jnp.mean((yb != 0).astype(jnp.float32)))
    assert 0.02 < drop_b < 0.3, drop_b

    # inplace path (input_output_aliases={1: 0})
    xc = jax.random.normal(jax.random.PRNGKey(2), (8, 128), dtype=jnp.float32)
    yc = jax.block_until_ready(fairseq_dropout(xc, p=0.5, seed=3,
                                               training=True, inplace=True))
    nzc = yc != 0
    assert jnp.allclose(jnp.where(nzc, yc, 0.0),
                        jnp.where(nzc, xc * 2.0, 0.0),
                        rtol=1e-5, atol=1e-5)
    drop_c = 1.0 - float(jnp.mean(nzc.astype(jnp.float32)))
    assert 0.3 < drop_c < 0.7, drop_c

    print("KERNEL_OK")
</pallas_src>

<mosaic_0001>
module attributes {stable_mosaic.version = 11 : i64} {
  func.func @probe_kernel(%arg0: memref<1xi32, #tpu.memory_space<smem>>, %arg1: memref<8x128xi32, #tpu.memory_space<vmem>>) attributes {dimension_semantics = [], scalar_prefetch = 0 : i64, scratch_operands = 0 : i64, tpu.core_type = #tpu.core_type<tc>} {
    %c0 = arith.constant 0 : index
    %0 = memref.load %arg0[%c0] : memref<1xi32, #tpu.memory_space<smem>>
    "tpu.prng_set_seed_32"(%0) : (i32) -> ()
    %1 = "tpu.prng_random_bits"() : () -> vector<8x128xi32>
    %2 = tpu.bitcast %1 : vector<8x128xi32> -> vector<8x128xi32>
    %c0_0 = arith.constant 0 : index
    %c0_1 = arith.constant 0 : index
    %3 = vector.load %arg1[%c0_0, %c0_1] : memref<8x128xi32, #tpu.memory_space<vmem>>, vector<8x128xi32>
    tpu.vector_store %arg1[%c0_0, %c0_1], %2 {strides = array<i32>} : memref<8x128xi32, #tpu.memory_space<vmem>>, vector<8x128xi32>,
    return
  }
}

module attributes {stable_mosaic.version = 11 : i64} {
  func.func @_dropout_kernel_hash(%arg0: i32, %arg1: memref<1xi32, #tpu.memory_space<smem>>, %arg2: memref<1x512xf32, #tpu.memory_space<vmem>>, %arg3: memref<1x512xf32, #tpu.memory_space<vmem>>) attributes {dimension_semantics = [#tpu.dimension_semantics<parallel>], iteration_bounds = array<i64: 1>, scalar_prefetch = 0 : i64, scratch_operands = 0 : i64, tpu.core_type = #tpu.core_type<tc>, window_params = [{transform_indices = @transform_0, window_bounds = array<i64: 1>}, {transform_indices = @transform_1, window_bounds = array<i64: 1, 512>}, {transform_indices = @transform_2, window_bounds = array<i64: 1, 512>}]} {
    %0 = tpu.iota {dimensions = array<i32: 0>} : vector<1x512xi32>
    %1 = tpu.iota {dimensions = array<i32: 1>} : vector<1x512xi32>
    %c512_i32 = arith.constant 512 : i32
    %2 = vector.broadcast %c512_i32 : i32 to vector<1x512xi32>
    %3 = arith.muli %0, %2 : vector<1x512xi32>
    %4 = arith.addi %3, %1 : vector<1x512xi32>
    %c512_i32_0 = arith.constant 512 : i32
    %5 = arith.muli %arg0, %c512_i32_0 : i32
    %6 = vector.broadcast %5 : i32 to vector<1x512xi32>
    %7 = arith.addi %4, %6 : vector<1x512xi32>
    %c0 = arith.constant 0 : index
    %8 = memref.load %arg1[%c0] : memref<1xi32, #tpu.memory_space<smem>>
    %c-2048144777_i32 = arith.constant -2048144777 : i32
    %9 = arith.muli %8, %c-2048144777_i32 : i32
    %c-1640531535_i32 = arith.constant -1640531535 : i32
    %10 = vector.broadcast %c-1640531535_i32 : i32 to vector<1x512xi32>
    %11 = arith.muli %7, %10 : vector<1x512xi32>
    %12 = vector.broadcast %9 : i32 to vector<1x512xi32>
    %13 = arith.addi %11, %12 : vector<1x512xi32>
    %c16_i32 = arith.constant 16 : i32
    %14 = vector.broadcast %c16_i32 : i32 to vector<1x512xi32>
    %15 = arith.shrui %13, %14 : vector<1x512xi32>
    %16 = arith.xori %13, %15 : vector<1x512xi32>
    %c-2048144789_i32 = arith.constant -2048144789 : i32
    %17 = vector.broadcast %c-2048144789_i32 : i32 to vector<1x512xi32>
    %18 = arith.muli %16, %17 : vector<1x512xi32>
    %c13_i32 = arith.constant 13 : i32
    %19 = vector.broadcast %c13_i32 : i32 to vector<1x512xi32>
    %20 = arith.shrui %18, %19 : vector<1x512xi32>
    %21 = arith.xori %18, %20 : vector<1x512xi32>
    %c1073741824_i32 = arith.constant 1073741824 : i32
    %22 = vector.broadcast %c1073741824_i32 : i32 to vector<1x512xi32>
    %23 = arith.cmpi uge, %21, %22 : vector<1x512xi32>
    %c0_1 = arith.constant 0 : index
    %c0_2 = arith.constant 0 : index
    %24 = vector.load %arg2[%c0_1, %c0_2] : memref<1x512xf32, #tpu.memory_space<vmem>>, vector<1x512xf32>
    %cst = arith.constant 1.33333337 : f32
    %25 = vector.broadcast %cst : f32 to vector<1x512xf32>
    %26 = arith.mulf %24, %25 : vector<1x512xf32>
    %cst_3 = arith.constant 0.000000e+00 : f32
    %27 = vector.broadcast %cst_3 : f32 to vector<1x512xf32>
    %28 = arith.select %23, %26, %27 : vector<1x512xi1>, vector<1x512xf32>
    %c0_4 = arith.constant 0 : index
    %c0_5 = arith.constant 0 : index
    %29 = vector.load %arg3[%c0_4, %c0_5] : memref<1x512xf32, #tpu.memory_space<vmem>>, vector<1x512xf32>
    tpu.vector_store %arg3[%c0_4, %c0_5], %28 {strides = array<i32>} : memref<1x512xf32, #tpu.memory_space<vmem>>, vector<1x512xf32>,
    return
  }
  func.func @transform_0(%arg0: i32) -> i32 {
    %c0_i32 = arith.constant 0 : i32
    %c0_i32_0 = arith.constant 0 : i32
    return %c0_i32 : i32
  }
  func.func @transform_1(%arg0: i32) -> (i32, i32) {
    %c0_i32 = arith.constant 0 : i32
    %c0_i32_0 = arith.constant 0 : i32
    return %arg0, %c0_i32 : i32, i32
  }
  func.func @transform_2(%arg0: i32) -> (i32, i32) {
    %c0_i32 = arith.constant 0 : i32
    %c0_i32_0 = arith.constant 0 : i32
    return %arg0, %c0_i32 : i32, i32
  }
}

</mosaic_0001>

<llo_original>
// kernel: tpu_custom_call.1
$region0: #{tpu_custom_call.1}
  #allocation0 [shape = 'u32[]', space=smem, size = 0x4, offset = 0x4, fixed_abs, tag = 'smem constant byte address 0x4 - core index']
  #allocation1 [shape = 'u32[72,128]{1,0:T(1,128)}', space=vmem, size = 0x9000, scoped, tag = 'internal scratch']
  #allocation2 [shape = 's32[1]{0:T(128)S(6)}', space=smem, size = 0x200, scoped, tag = 'scoped memory for tpu_custom_call.1']
  %s0 = inlined_call_operand.<no memory space> [shape: s32[1], index: 0, kind: input, shape index: {}]
  %s1 = inlined_call_operand.hbm [shape: u32[8,128], index: 1, kind: output, shape index: {}]
  %s2 = sld [smem:[#allocation0]]
  $region14: #{tpu_custom_call.1} parent=0
    _
  %s4 = ssub.s32 1, %s2
  %s5 = scalar_select 0, %s4, %s2
  %6 = sst [smem:[#allocation2]] %s0
  $region1: #{tpu_custom_call.1} parent=0
    #allocation3 [shape = 'u8[4096]{0}', space=vmem, size = 0x1000, scoped, tag = 'output window, operand 0, single buffered']
    #allocation4 [shape = 's32[1]{0}', space=sflag, size = 0x4, scoped, tag = 'scoped memory for tpu_custom_call.1']
    %7 = vsyncpa [#allocation4], 0
    // Predicated region
    $region2: #{tpu_custom_call.1} parent=1 // pred_check
      _
    $region3: #{tpu_custom_call.1} parent=1 // pred_check_branch
      %9 = sbr.rel (0) target = $region5
    $region4: #{tpu_custom_call.1} parent=1 // pred_region
      _
    $region5: #{tpu_custom_call.1} parent=1 // pred_fallthru
      _
    %s10 = sld [smem:[#allocation2]]
    %v11 = vlaneseq
    %v12 = vstv %s10
    %v13 = vxor.u32 %v12, %v12
    %v14 = vxor.u32 %v13, 466688986
    %v15 = vadd.s32 %v11, %v12
    %v16 = vadd.s32 %v15, %v15
    %v17 = vshll.u32 %v15, 13
    %v18 = vshrl.u32 %v15, 19
    %v19 = vor.u32 %v17, %v18
    %v20 = vxor.u32 %v16, %v19
    %v21 = vadd.s32 %v16, %v20
    %v22 = vshll.u32 %v20, 15
    %v23 = vshrl.u32 %v20, 17
    %v24 = vor.u32 %v22, %v23
    %v25 = vxor.u32 %v21, %v24
    %v26 = vadd.s32 %v21, %v25
    %v27 = vshll.u32 %v25, 26
    %v28 = vshrl.u32 %v25, 6
    %v29 = vor.u32 %v27, %v28
    %v30 = vxor.u32 %v26, %v29
    %v31 = vadd.s32 %v26, %v30
    %v32 = vshll.u32 %v30, 6
    %v33 = vshrl.u32 %v30, 26
    %v34 = vor.u32 %v32, %v33
    %v35 = vxor.u32 %v31, %v34
    %v36 = vadd.s32 %v31, %v12
    %v37 = vadd.s32 %v35, %v14
    %v38 = vadd.s32 %v37, 1
    %v39 = vadd.s32 %v36, %v38
    %v40 = vshll.u32 %v38, 17
    %v41 = vshrl.u32 %v38, 15
    %v42 = vor.u32 %v40, %v41
    %v43 = vxor.u32 %v39, %v42
    %v44 = vadd.s32 %v39, %v43
    %v45 = vshll.u32 %v43, 29
    %v46 = vshrl.u32 %v43, 3
    %v47 = vor.u32 %v45, %v46
    %v48 = vxor.u32 %v44, %v47
    %v49 = vadd.s32 %v44, %v48
    %v50 = vshll.u32 %v48, 16
    %v51 = vshrl.u32 %v48, 16
    %v52 = vor.u32 %v50, %v51
    %v53 = vxor.u32 %v49, %v52
    %v54 = vadd.s32 %v49, %v53
    %v55 = vshll.u32 %v53, 24
    %v56 = vshrl.u32 %v53, 8
    %v57 = vor.u32 %v55, %v56
    %v58 = vxor.u32 %v54, %v57
    %v59 = vadd.s32 %v54, %v14
    %v60 = vadd.s32 %v58, %v12
    %v61 = vadd.s32 %v60, 2
    %v62 = vadd.s32 %v59, %v61
    %v63 = vshll.u32 %v61, 13
    %v64 = vshrl.u32 %v61, 19
    %v65 = vor.u32 %v63, %v64
    %v66 = vxor.u32 %v62, %v65
    %v67 = vadd.s32 %v62, %v66
    %v68 = vshll.u32 %v66, 15
    %v69 = vshrl.u32 %v66, 17
    %v70 = vor.u32 %v68, %v69
    %v71 = vxor.u32 %v67, %v70
    %v72 = vadd.s32 %v67, %v71
    %v73 = vshll.u32 %v71, 26
    %v74 = vshrl.u32 %v71, 6
    %v75 = vor.u32 %v73, %v74
    %v76 = vxor.u32 %v72, %v75
    %v77 = vadd.s32 %v72, %v76
    %v78 = vshll.u32 %v76, 6
    %v79 = vshrl.u32 %v76, 26
    %v80 = vor.u32 %v78, %v79
    %v81 = vxor.u32 %v77, %v80
    %v82 = vadd.s32 %v77, %v12
    %v83 = vadd.s32 %v81, %v12
    %v84 = vadd.s32 %v83, 3
    %v85 = vadd.s32 %v82, %v84
    %v86 = vshll.u32 %v84, 17
    %v87 = vshrl.u32 %v84, 15
    %v88 = vor.u32 %v86, %v87
    %v89 = vxor.u32 %v85, %v88
    %v90 = vadd.s32 %v85, %v89
    %v91 = vshll.u32 %v89, 29
    %v92 = vshrl.u32 %v89, 3
    %v93 = vor.u32 %v91, %v92
    %v94 = vxor.u32 %v90, %v93
    %v95 = vadd.s32 %v90, %v94
    %v96 = vshll.u32 %v94, 16
    %v97 = vshrl.u32 %v94, 16
    %v98 = vor.u32 %v96, %v97
    %v99 = vxor.u32 %v95, %v98
    %v100 = vadd.s32 %v95, %v99
    %v101 = vshll.u32 %v99, 24
    %v102 = vshrl.u32 %v99, 8
    %v103 = vor.u32 %v101, %v102
    %v104 = vxor.u32 %v100, %v103
    %v105 = vadd.s32 %v100, %v12
    %v106 = vadd.s32 %v104, %v14
    %v107 = vadd.s32 %v106, 4
    %v108 = vadd.s32 %v105, %v107
    %v109 = vshll.u32 %v107, 13
    %v110 = vshrl.u32 %v107, 19
    %v111 = vor.u32 %v109, %v110
    %v112 = vxor.u32 %v108, %v111
    %v113 = vadd.s32 %v108, %v112
    %v114 = vshll.u32 %v112, 15
    %v115 = vshrl.u32 %v112, 17
    %v116 = vor.u32 %v114, %v115
    %v117 = vxor.u32 %v113, %v116
    %v118 = vadd.s32 %v113, %v117
    %v119 = vshll.u32 %v117, 26
    %v120 = vshrl.u32 %v117, 6
    %v121 = vor.u32 %v119, %v120
    %v122 = vxor.u32 %v118, %v121
    %v123 = vadd.s32 %v118, %v122
    %v124 = vshll.u32 %v122, 6
    %v125 = vshrl.u32 %v122, 26
    %v126 = vor.u32 %v124, %v125
    %v127 = vxor.u32 %v123, %v126
    %v128 = vadd.s32 %v123, %v14
    %v129 = vadd.s32 %v127, %v12
    %v130 = vadd.s32 %v129, 5
    %v131 = vxor.u32 %v128, %v130
    %132 = set.rngseed %v131
    %v133 = vrng
    %134 = vst [vmem:[#allocation3] sm:$0xff] %v133
    // Predicated region
    $region6: #{tpu_custom_call.1} parent=1 // pred_check
      _
    $region7: #{tpu_custom_call.1} parent=1 // pred_check_branch
      %136 = sbr.rel (0) target = $region9
    $region8: #{tpu_custom_call.1} parent=1 // pred_region
      %138 = vsyncadd [#allocation4], 0
      %s140 = sshll.u32 [#allocation3], 4
      %s141 = int_to_ptr.vmem [resolvable:$true] %s140
      %s142 = sshll.u32 %s1, 4
      %s143 = int_to_ptr.hbm [resolvable:$true] %s142
      %145 = dma.vmem_to_hbm [thread:$0]  %s141, 128, %s143, [#allocation4]
    $region9: #{tpu_custom_call.1} parent=1 // pred_fallthru
      _
    // Predicated region
    $region10: #{tpu_custom_call.1} parent=1 // pred_check
      _
    $region11: #{tpu_custom_call.1} parent=1 // pred_check_branch
      %147 = sbr.rel (0) target = $region13
    $region12: #{tpu_custom_call.1} parent=1 // pred_region
      %149 = dma.done [#allocation4], 128
    $region13: #{tpu_custom_call.1} parent=1 // pred_fallthru
      _
    %150 = vsyncpa [#allocation4], 1

// kernel: tpu_custom_call.1
$region0: #{tpu_custom_call.1}
  #allocation0 [shape = 'u32[]', space=smem, size = 0x4, offset = 0x4, fixed_abs, tag = 'smem constant byte address 0x4 - core index']
  #allocation1 [shape = 'u32[72,128]{1,0:T(1,128)}', space=vmem, size = 0x9000, scoped, tag = 'internal scratch']
  #allocation2 [shape = 's32[1]{0:T(128)S(6)}', space=smem, size = 0x200, scoped, tag = 'scoped memory for tpu_custom_call.1']
  %s0 = inlined_call_operand.<no memory space> [shape: s32[1], index: 0, kind: input, shape index: {}]
  %s1 = inlined_call_operand.hbm [shape: f32[1,512], index: 1, kind: input, shape index: {}]
  %s2 = inlined_call_operand.hbm [shape: f32[1,512], index: 2, kind: output, shape index: {}]
  %s3 = sld [smem:[#allocation0]]
  $region22: #{tpu_custom_call.1} parent=0
    _
  %s5 = ssub.s32 1, %s3
  %s6 = scalar_select 0, %s5, %s3
  %7 = sst [smem:[#allocation2]] %s0
  $region1: #{tpu_custom_call.1} parent=0
    #allocation3 [shape = 'u8[2048]{0}', space=vmem, size = 0x800, scoped, tag = 'input window, operand 1, single buffered']
    #allocation4 [shape = 's32[1]{0}', space=sflag, size = 0x4, scoped, tag = 'scoped memory for tpu_custom_call.1']
    #allocation5 [shape = 's32[1]{0}', space=sflag, size = 0x4, scoped, tag = 'scoped memory for tpu_custom_call.1']
    #allocation6 [shape = 'u8[2048]{0}', space=vmem, size = 0x800, scoped, tag = 'output window, operand 0, single buffered']
    %8 = vsyncpa [#allocation4], 0
    %9 = vsyncpa [#allocation5], 0
    // Predicated region
    $region2: #{tpu_custom_call.1} parent=1 // pred_check
      _
    $region3: #{tpu_custom_call.1} parent=1 // pred_check_branch
      %11 = sbr.rel (0) target = $region5
    $region4: #{tpu_custom_call.1} parent=1 // pred_region
      _
    $region5: #{tpu_custom_call.1} parent=1 // pred_fallthru
      _
    // Predicated region
    $region6: #{tpu_custom_call.1} parent=1 // pred_check
      _
    $region7: #{tpu_custom_call.1} parent=1 // pred_check_branch
      %13 = sbr.rel (0) target = $region9
    $region8: #{tpu_custom_call.1} parent=1 // pred_region
      %15 = vsyncadd [#allocation4], 0
      %s17 = sshll.u32 %s1, 4
      %s18 = int_to_ptr.hbm [resolvable:$true] %s17
      %s19 = sshll.u32 [#allocation3], 4
      %s20 = int_to_ptr.vmem [resolvable:$true] %s19
      %22 = dma.hbm_to_vmem [thread:$0]  %s18, 64, %s20, [#allocation4]
    $region9: #{tpu_custom_call.1} parent=1 // pred_fallthru
      _
    // Predicated region
    $region10: #{tpu_custom_call.1} parent=1 // pred_check
      _
    $region11: #{tpu_custom_call.1} parent=1 // pred_check_branch
      %24 = sbr.rel (0) target = $region13
    $region12: #{tpu_custom_call.1} parent=1 // pred_region
      %26 = dma.done [#allocation4], 64
    $region13: #{tpu_custom_call.1} parent=1 // pred_fallthru
      _
    %v27 = vlaneseq
    %v28 = vshrl.u32 %v27, 7
    %v29 = vlaneseq
    %v30 = vand.u32 %v29, 127
    %v31 = vadd.s32 %v30, 128
    %v32 = vadd.s32 %v30, 256
    %v33 = vadd.s32 %v30, 384
    %v34 = vmul.u32 %v28, 512
    %v35 = vadd.s32 %v34, %v30
    %v36 = vadd.s32 %v34, %v31
    %v37 = vadd.s32 %v34, %v32
    %v38 = vadd.s32 %v34, %v33
    %s39 = smul.u32 0, 512
    %v40 = vstv %s39
    %v41 = vadd.s32 %v35, %v40
    %v42 = vadd.s32 %v36, %v40
    %v43 = vadd.s32 %v37, %v40
    %v44 = vadd.s32 %v38, %v40
    %s45 = sld [smem:[#allocation2]]
    %s46 = smul.u32 %s45, 2246822519
    %v47 = vmul.u32 %v41, 2654435761
    %v48 = vmul.u32 %v42, 2654435761
    %v49 = vmul.u32 %v43, 2654435761
    %v50 = vmul.u32 %v44, 2654435761
    %v51 = vstv %s46
    %v52 = vadd.s32 %v47, %v51
    %v53 = vadd.s32 %v48, %v51
    %v54 = vadd.s32 %v49, %v51
    %v55 = vadd.s32 %v50, %v51
    %v56 = vshrl.u32 %v52, 16
    %v57 = vshrl.u32 %v53, 16
    %v58 = vshrl.u32 %v54, 16
    %v59 = vshrl.u32 %v55, 16
    %v60 = vxor.u32 %v52, %v56
    %v61 = vxor.u32 %v53, %v57
    %v62 = vxor.u32 %v54, %v58
    %v63 = vxor.u32 %v55, %v59
    %v64 = vmul.u32 %v60, 2246822507
    %v65 = vmul.u32 %v61, 2246822507
    %v66 = vmul.u32 %v62, 2246822507
    %v67 = vmul.u32 %v63, 2246822507
    %v68 = vshrl.u32 %v64, 13
    %v69 = vshrl.u32 %v65, 13
    %v70 = vshrl.u32 %v66, 13
    %v71 = vshrl.u32 %v67, 13
    %v72 = vxor.u32 %v64, %v68
    %v73 = vxor.u32 %v65, %v69
    %v74 = vxor.u32 %v66, %v70
    %v75 = vxor.u32 %v67, %v71
    %v76 = vadd.s32 %v72, 2147483648
    %vm78 = vcmp.ge.s32.totalorder %v76, 3221225472
    %v79 = vadd.s32 %v73, 2147483648
    %vm81 = vcmp.ge.s32.totalorder %v79, 3221225472
    %v82 = vadd.s32 %v74, 2147483648
    %vm84 = vcmp.ge.s32.totalorder %v82, 3221225472
    %v85 = vadd.s32 %v75, 2147483648
    %vm87 = vcmp.ge.s32.totalorder %v85, 3221225472
    %v88 = vld [vmem:[#allocation3] sm:$0xf]
    %v89 = vmul.f32 %v88, 1.3333334
    %v91 = vperm.slane %v89, 0
    %v92 = vperm.slane %v89, 1
    %v93 = vperm.slane %v89, 2
    %v94 = vperm.slane %v89, 3
    %v99 = vsel %vm78, %v91, 0.0
    %v100 = vsel %vm81, %v92, 0.0
    %v101 = vsel %vm84, %v93, 0.0
    %v102 = vsel %vm87, %v94, 0.0
    %v107 = vrot.slane %v100, 7
    %v108 = vrot.slane %v101, 6
    %v109 = vrot.slane %v102, 5
    %vm110 = vcmask 1040384
    %v111 = vsel %vm110, %v99, %v107
    %vm112 = vcmask 1042434
    %v113 = vsel %vm112, %v108, %v109
    %vm114 = vcmask 1041408
    %v115 = vsel %vm114, %v111, %v113
    %v117 = vlaneseq
    %vm118 = vcmp.ge.s32.totalorder %v117, 0
    %vm119 = vcmp.lt.s32.totalorder %v117, 512
    %vm120 = vmand %vm118, %vm119
    %121 = vst.msk [vmem:[#allocation6] sm:$0xf] %vm120, %v115
    // Predicated region
    $region14: #{tpu_custom_call.1} parent=1 // pred_check
      _
    $region15: #{tpu_custom_call.1} parent=1 // pred_check_branch
      %123 = sbr.rel (0) target = $region17
    $region16: #{tpu_custom_call.1} parent=1 // pred_region
      %125 = vsyncadd [#allocation5], 0
      %s127 = sshll.u32 [#allocation6], 4
      %s128 = int_to_ptr.vmem [resolvable:$true] %s127
      %s129 = sshll.u32 %s2, 4
      %s130 = int_to_ptr.hbm [resolvable:$true] %s129
      %132 = dma.vmem_to_hbm [thread:$0]  %s128, 64, %s130, [#allocation5]
    $region17: #{tpu_custom_call.1} parent=1 // pred_fallthru
      _
    // Predicated region
    $region18: #{tpu_custom_call.1} parent=1 // pred_check
      _
    $region19: #{tpu_custom_call.1} parent=1 // pred_check_branch
      %134 = sbr.rel (0) target = $region21
    $region20: #{tpu_custom_call.1} parent=1 // pred_region
      %136 = dma.done [#allocation5], 64
    $region21: #{tpu_custom_call.1} parent=1 // pred_fallthru
      _
    %137 = vsyncpa [#allocation4], 1
    %138 = vsyncpa [#allocation5], 1

</llo_original>
